<compile_context>
chip_gen: v5e
topology: v5e:2x2
jax: 0.10.0
libtpu: 0.0.40
codegen_flags: <defaults>
</compile_context>

<pallas_src>
import functools

import numpy as np
import jax
import jax.numpy as jnp
from jax import lax
from jax.experimental import pallas as pl
from jax.experimental.pallas import tpu as pltpu


def _gram_kernel(x_ref, g_ref, *, precision):
    """Accumulate x^T x (contract over rows) into the resident f32 output block."""
    i = pl.program_id(1)           # reduction (row-tile) axis

    @pl.when(i == 0)
    def _init():
        g_ref[...] = jnp.zeros_like(g_ref)

    x = x_ref[...]                 # (TM, Dp), native dtype (bf16 / f32 / ...)
    g_ref[...] += lax.dot_general(
        x, x,
        dimension_numbers=(((0,), (0,)), ((), ())),   # grad-weight form: x^T x
        preferred_element_type=jnp.float32,
        precision=precision,
    )


def _pick_tm(M: int, D_p: int, itemsize: int, budget_bytes: int = 30 * 2**20) -> int:
    """Largest row tile (multiple of 8, up to 2048) whose double-buffered
    working set (input block + Gram output block) fits the VMEM budget and
    whose zero-padding waste stays modest."""
    m_cap = max(8, ((M + 7) // 8) * 8)
    out_bytes = 2 * D_p * D_p * 4                     # double-buffered f32 Gram block
    tm = 8
    for cand in (2048, 1024, 512, 256, 128, 64, 32, 16, 8):
        if cand > m_cap:
            continue
        in_bytes = 2 * cand * D_p * itemsize          # double-buffered input block
        pad = (-M) % cand
        if in_bytes + out_bytes <= budget_bytes and (pad * 4 <= M or cand == 8):
            tm = cand
            break
    return min(tm, m_cap)


def evd_rq_loss(a, alpha: float = 10.0, beta: float = 30.0,
                reduction: str = 'mean',
                precision: lax.Precision = lax.Precision.DEFAULT):
    """JAX/Pallas equivalent of EVDRQ.forward (a_proj=None)."""
    N, r, D = a.shape
    assert r >= 2, 'Should have at least one pair.'
    assert N % 2 == 0, 'Even batch size assumed (torch.chunk(2) halves).'
    M = (N // 2) * r

    # (N, r, D) -> (2, M, D): pure leading-dim collapse; x[0] = a1, x[1] = a2.
    # NOTE: no dtype upcast here - DMA the native dtype, accumulate in f32 on chip.
    x = a.reshape(2, M, D)

    itemsize = a.dtype.itemsize
    # Lane padding: map D onto full 128-lane vregs (no-op for real 128-multiples).
    D_p = D if D % 128 == 0 else ((D + 127) // 128) * 128
    TM = _pick_tm(M, D_p, itemsize)
    M_p = ((M + TM - 1) // TM) * TM
    if (M_p != M) or (D_p != D):
        x = jnp.pad(x, ((0, 0), (0, M_p - M), (0, D_p - D)))
    nm = M_p // TM

    vmem_need = 2 * TM * D_p * itemsize + 2 * D_p * D_p * 4
    vmem_limit = int(min(64 * 2**20, max(32 * 2**20, vmem_need + (4 << 20))))

    kernel = functools.partial(_gram_kernel, precision=precision)
    g = pl.pallas_call(
        kernel,
        grid=(2, nm),
        in_specs=[pl.BlockSpec((None, TM, D_p), lambda h, i: (h, i, 0))],
        out_specs=pl.BlockSpec((None, D_p, D_p), lambda h, i: (h, 0, 0)),
        out_shape=jax.ShapeDtypeStruct((2, D_p, D_p), jnp.float32),
        compiler_params=pltpu.CompilerParams(
            dimension_semantics=("parallel", "arbitrary"),
            vmem_limit_bytes=vmem_limit),
    )(x)

    # ---- tiny O(D^2) epilogue in plain JAX (per review) ----
    g = g[:, :D, :D]                      # drop zero-padded dims
    inv_m = jnp.float32(1.0 / M)          # normalize with the TRUE M
    g1 = g[0] * inv_m                     # (D, D)  == a1.T @ a1 / M
    g2 = g[1] * inv_m                     # (D, D)  == a2.T @ a2 / M
    m1 = jnp.diagonal(g1)                 # (D,) mean of squares, half 1
    m2 = jnp.diagonal(g2)                 # (D,) mean of squares, half 2

    # variance (diagonal) term: mean over all N*r rows == 0.5*(m1+m2)
    c_ii = m1 * m2 - (m1 + m2) + 1.0
    diag_loss = jnp.mean(c_ii)

    # covariance (off-diagonal) term via total-minus-trace, consistent Gram diag
    offd_loss = (jnp.sum(g1 * g2) - jnp.sum(m1 * m2)) / (D * (D - 1))

    # invariance term: reference masks pairwise distances with eye(r) (self-pairs) -> 0
    inv_loss = jnp.zeros((N,), jnp.float32)
    rq = inv_loss + alpha * diag_loss + beta * offd_loss      # (N,)

    loss_dict = {
        'train/total_loss': jnp.mean(rq),
        'train/invariance_loss': jnp.mean(inv_loss),
        'train/diagonal_loss': diag_loss,
        'train/off_diagonal_loss': offd_loss,
    }
    if reduction == 'mean':
        rq = jnp.mean(rq)
    return rq, loss_dict


def _reference_np(a64, alpha, beta):
    """Literal numpy (f64) transcription of the PyTorch forward (a_proj=None)."""
    a = np.asarray(a64, np.float64)
    N, r, D = a.shape
    diff = a[:, None, :, :] - a[:, :, None, :]
    sq = (diff ** 2).sum(-1)                          # (N, r, r)
    mask_ii = np.eye(r, dtype=bool)
    inv = sq[:, mask_ii].reshape(N, -1).mean(1)       # (N,)  (self-pairs -> zeros)
    a1 = a[: N // 2].reshape(-1, D)
    a2 = a[N // 2:].reshape(-1, D)
    a_all = a.reshape(-1, D)
    c_ii = (a1 ** 2).mean(0) * (a2 ** 2).mean(0) - 2 * (a_all ** 2).mean(0) + 1
    diag_loss = c_ii.mean()
    g1 = a1.T @ a1 / a1.shape[0]
    g2 = a2.T @ a2 / a2.shape[0]
    c_ij = g1 * g2
    offd_loss = c_ij[~np.eye(D, dtype=bool)].mean()
    return (inv + alpha * diag_loss + beta * offd_loss).mean()


if __name__ == "__main__":
    key = jax.random.PRNGKey(0)
    N, r, D = 8, 4, 32
    a_f32 = jax.random.normal(key, (N, r, D), dtype=jnp.float32)

    # 1) Typical production path: native bf16 input, single-pass MXU (DEFAULT).
    a_bf16 = a_f32.astype(jnp.bfloat16)
    loss_bf, _ = evd_rq_loss(a_bf16, alpha=10.0, beta=30.0, reduction='mean')
    loss_bf = jax.block_until_ready(loss_bf)
    ref_bf = _reference_np(np.asarray(jax.device_get(a_bf16)).astype(np.float64),
                           10.0, 30.0)
    assert np.allclose(float(loss_bf), float(ref_bf), rtol=1e-3, atol=1e-3), (
        float(loss_bf), float(ref_bf))

    # 2) f32 input with the precision flag raised for tighter numerics.
    loss_f32, loss_dict = evd_rq_loss(a_f32, alpha=10.0, beta=30.0,
                                      reduction='mean',
                                      precision=lax.Precision.HIGH)
    loss_f32 = jax.block_until_ready(loss_f32)
    ref_f32 = _reference_np(np.asarray(a_f32).astype(np.float64), 10.0, 30.0)
    assert np.allclose(float(loss_f32), float(ref_f32), rtol=1e-3, atol=1e-3), (
        float(loss_f32), float(ref_f32))

    print("KERNEL_OK")
</pallas_src>

<mosaic_0001>
module attributes {stable_mosaic.version = 11 : i64} {
  func.func @_gram_kernel(%arg0: i32, %arg1: i32, %arg2: memref<1x16x128xbf16, #tpu.memory_space<vmem>>, %arg3: memref<1x128x128xf32, #tpu.memory_space<vmem>>) attributes {dimension_semantics = [#tpu.dimension_semantics<parallel>, #tpu.dimension_semantics<arbitrary>], iteration_bounds = array<i64: 2, 1>, scalar_prefetch = 0 : i64, scratch_operands = 0 : i64, tpu.core_type = #tpu.core_type<tc>, window_params = [{transform_indices = @transform_0, window_bounds = array<i64: 1, 16, 128>}, {transform_indices = @transform_1, window_bounds = array<i64: 1, 128, 128>}]} {
    %c0_i32 = arith.constant 0 : i32
    %0 = arith.cmpi eq, %arg1, %c0_i32 : i32
    %1 = arith.extui %0 : i1 to i32
    %c0_i32_0 = arith.constant 0 : i32
    %2 = arith.cmpi ne, %1, %c0_i32_0 : i32
    scf.if %2 {
      %cst_9 = arith.constant 0.000000e+00 : f32
      %12 = vector.broadcast %cst_9 : f32 to vector<128x128xf32>
      %c0_10 = arith.constant 0 : index
      %c0_11 = arith.constant 0 : index
      %c0_12 = arith.constant 0 : index
      %13 = vector.load %arg3[%c0_10, %c0_11, %c0_12] : memref<1x128x128xf32, #tpu.memory_space<vmem>>, vector<1x128x128xf32>
      %14 = vector.shape_cast %13 : vector<1x128x128xf32> to vector<128x128xf32>
      %15 = vector.shape_cast %12 : vector<128x128xf32> to vector<1x128x128xf32>
      tpu.vector_store %arg3[%c0_10, %c0_11, %c0_12], %15 {strides = array<i32>} : memref<1x128x128xf32, #tpu.memory_space<vmem>>, vector<1x128x128xf32>,
    } else {
    }
    %c0 = arith.constant 0 : index
    %c0_1 = arith.constant 0 : index
    %c0_2 = arith.constant 0 : index
    %3 = vector.load %arg2[%c0, %c0_1, %c0_2] : memref<1x16x128xbf16, #tpu.memory_space<vmem>>, vector<1x16x128xbf16>
    %4 = vector.shape_cast %3 : vector<1x16x128xbf16> to vector<16x128xbf16>
    %c0_3 = arith.constant 0 : index
    %c0_4 = arith.constant 0 : index
    %c0_5 = arith.constant 0 : index
    %5 = vector.load %arg3[%c0_3, %c0_4, %c0_5] : memref<1x128x128xf32, #tpu.memory_space<vmem>>, vector<1x128x128xf32>
    %6 = vector.shape_cast %5 : vector<1x128x128xf32> to vector<128x128xf32>
    %cst = arith.constant dense<0.000000e+00> : vector<128x128xf32>
    %7 = tpu.matmul %4, %4, %cst {dimension_numbers = #tpu.dot_dimension_numbers<[0], [0], [1], [1], [0, 1, 1, 1], [], []>} : vector<16x128xbf16>, vector<16x128xbf16>, vector<128x128xf32> -> vector<128x128xf32>
    %8 = arith.addf %6, %7 : vector<128x128xf32>
    %c0_6 = arith.constant 0 : index
    %c0_7 = arith.constant 0 : index
    %c0_8 = arith.constant 0 : index
    %9 = vector.load %arg3[%c0_6, %c0_7, %c0_8] : memref<1x128x128xf32, #tpu.memory_space<vmem>>, vector<1x128x128xf32>
    %10 = vector.shape_cast %9 : vector<1x128x128xf32> to vector<128x128xf32>
    %11 = vector.shape_cast %8 : vector<128x128xf32> to vector<1x128x128xf32>
    tpu.vector_store %arg3[%c0_6, %c0_7, %c0_8], %11 {strides = array<i32>} : memref<1x128x128xf32, #tpu.memory_space<vmem>>, vector<1x128x128xf32>,
    return
  }
  func.func @transform_0(%arg0: i32, %arg1: i32) -> (i32, i32, i32) {
    %c0_i32 = arith.constant 0 : i32
    %c0_i32_0 = arith.constant 0 : i32
    return %arg0, %arg1, %c0_i32 : i32, i32, i32
  }
  func.func @transform_1(%arg0: i32, %arg1: i32) -> (i32, i32, i32) {
    %c0_i32 = arith.constant 0 : i32
    %c0_i32_0 = arith.constant 0 : i32
    %c0_i32_1 = arith.constant 0 : i32
    return %arg0, %c0_i32, %c0_i32_0 : i32, i32, i32
  }
}

</mosaic_0001>

<llo_original>
// kernel: tpu_custom_call.1
$region0: #{tpu_custom_call.1}
  #allocation0 [shape = 'u32[]', space=smem, size = 0x4, offset = 0x4, fixed_abs, tag = 'smem constant byte address 0x4 - core index']
  #allocation1 [shape = 'u32[72,128]{1,0:T(1,128)}', space=vmem, size = 0x9000, scoped, tag = 'internal scratch']
  %s0 = inlined_call_operand.hbm [shape: bf16[2,16,128], index: 0, kind: input, shape index: {}]
  %s1 = inlined_call_operand.hbm [shape: f32[2,128,128], index: 1, kind: output, shape index: {}]
  %s2 = sld [smem:[#allocation0]]
  $region45: #{tpu_custom_call.1} parent=0
    _
  %s4 = ssub.s32 1, %s2
  %s5 = scalar_select 0, %s4, %s2
  $region1: #{tpu_custom_call.1} parent=0
    #allocation2 [shape = 'u8[8192]{0}', space=vmem, size = 0x2000, scoped, tag = 'input window, operand 0']
    #allocation3 [shape = 's32[2]{0}', space=sflag, size = 0x8, scoped, tag = 'scoped memory for tpu_custom_call.1']
    #allocation4 [shape = 's32[2]{0}', space=sflag, size = 0x8, scoped, tag = 'scoped memory for tpu_custom_call.1']
    #allocation5 [shape = 'u8[131072]{0}', space=vmem, size = 0x20000, scoped, tag = 'output window, operand 0']
    %6 = vsyncpa [#allocation3], 0
    %s7 = scalar_lea.sflag [#allocation3], 1
    %8 = vsyncpa %s7, 0
    %9 = vsyncpa [#allocation4], 0
    %s10 = scalar_lea.sflag [#allocation4], 1
    %11 = vsyncpa %s10, 0
    loop: start=0, step=1, limit=4
    $region2: #{tpu_custom_call.1} parent=1 // loop_pre_header
      _
    $region3: #{tpu_custom_call.1} parent=1 // loop_header
      %s13 = sphi 0, %s17
      %p14 = scmp.ge.s32.totalorder %s13, 4
      %s20 = sphi 0, %s32
      %s21 = sphi 0, %s28
      %s22 = sphi 0, %s20
      %s23 = sphi 0, %s21
      %s24 = sphi 0, %s22
      %s25 = sphi 0, %s23
      %s37 = sphi 0, %s39
      %s40 = sphi 0, %s37
      %s41 = sphi 0, %s40
      %s57 = sphi 0, %s41
      %s63 = sphi 0, %s65
      %s66 = sphi 0, %s63
      %s67 = sphi 0, %s66
      %s83 = sphi 0, %s67
    $region4: #{tpu_custom_call.1} parent=1 // loop_header_branch
      %16 = sbr.rel (%p14) target = $region8
    $region5: #{tpu_custom_call.1} parent=1 // loop_body
      %s18 = ssub.s32 %s13, 1
      %s19 = ssub.s32 %s13, 2
      %s26 = sadd.s32 1, %s21
      %p27 = scmp.ge.s32.totalorder %s26, 1
      %s28 = scalar_select %p27, 0, %s26
      %s29 = sadd.s32 1, %s20
      %s30 = scalar_select %p27, %s29, %s20
      %p31 = scmp.ge.s32.totalorder %s30, 2
      %s32 = scalar_select %p31, 0, %s30
      %s33 = ssub.s32 %s20, %s32
      %s34 = ssub.s32 %s21, %s28
      %s35 = sor.u32 %s33, %s34
      %p36 = scmp.eq.s32.totalorder %s35, 0
      %s38 = sadd.s32 %s37, 1
      %s39 = scalar_select %p36, %s37, %s38
      %p42 = pneg %p36
      %p43 = scmp.eq.s32.totalorder %s13, 1
      %p44 = por %p42, %p43
      %p45 = scmp.ne.s32.totalorder %s37, %s40
      %p46 = scmp.eq.s32.totalorder %s13, 0
      %p47 = por %p45, %p46
      %p48 = scmp.ne.s32.totalorder %s37, %s40
      %p49 = scmp.eq.s32.totalorder %s18, 1
      %p50 = por %p48, %p49
      %p51 = scmp.ne.s32.totalorder %s40, %s41
      %p52 = scmp.eq.s32.totalorder %s18, 0
      %p53 = por %p51, %p52
      %p54 = scmp.ne.s32.totalorder %s40, %s41
      %p55 = scmp.eq.s32.totalorder %s19, 1
      %p56 = por %p54, %p55
      %p58 = scmp.ne.s32.totalorder %s41, %s57
      %p59 = scmp.eq.s32.totalorder %s19, 0
      %p60 = por %p58, %p59
      %s61 = ssub.s32 %s20, %s32
      %p62 = scmp.eq.s32.totalorder %s61, 0
      %s64 = sadd.s32 %s63, 1
      %s65 = scalar_select %p62, %s63, %s64
      %p68 = pneg %p62
      %p69 = scmp.eq.s32.totalorder %s13, 1
      %p70 = por %p68, %p69
      %p71 = scmp.ne.s32.totalorder %s63, %s66
      %p72 = scmp.eq.s32.totalorder %s13, 0
      %p73 = por %p71, %p72
      %p74 = scmp.ne.s32.totalorder %s63, %s66
      %p75 = scmp.eq.s32.totalorder %s18, 1
      %p76 = por %p74, %p75
      %p77 = scmp.ne.s32.totalorder %s66, %s67
      %p78 = scmp.eq.s32.totalorder %s18, 0
      %p79 = por %p77, %p78
      %p80 = scmp.ne.s32.totalorder %s66, %s67
      %p81 = scmp.eq.s32.totalorder %s19, 1
      %p82 = por %p80, %p81
      %p84 = scmp.ne.s32.totalorder %s67, %s83
      %p85 = scmp.eq.s32.totalorder %s19, 0
      %p86 = por %p84, %p85
      %p87 = scmp.le.s32.totalorder 1, %s13
      %p88 = scmp.lt.s32.totalorder %s13, 3
      %p89 = pnand %p87, %p88
      %p90 = pneg %p89
      // Predicated region
      $region9: #{tpu_custom_call.1} parent=5 // pred_check
        _
      $region10: #{tpu_custom_call.1} parent=5 // pred_check_branch
        %92 = sbr.rel (%p89) target = $region12
      $region11: #{tpu_custom_call.1} parent=5 // pred_region
        %s93 = ssub.s32 %s13, 1
      $region12: #{tpu_custom_call.1} parent=5 // pred_fallthru
        _
      %p94 = scmp.lt.s32.totalorder %s13, 2
      // Predicated region
      $region13: #{tpu_custom_call.1} parent=5 // pred_check
        %p95 = pneg %p94
      $region14: #{tpu_custom_call.1} parent=5 // pred_check_branch
        %97 = sbr.rel (%p95) target = $region16
      $region15: #{tpu_custom_call.1} parent=5 // pred_region
        // Predicated region
        $region17: #{tpu_custom_call.1} parent=15 // pred_check
          %p98 = pneg %p47
        $region18: #{tpu_custom_call.1} parent=15 // pred_check_branch
          %100 = sbr.rel (%p98) target = $region20
        $region19: #{tpu_custom_call.1} parent=15 // pred_region
          %s101 = sand.u32 %s37, 1
          %s102 = scalar_lea.sflag [#allocation3], %s101
          %s103 = sand.u32 %s37, 1
          %s104 = smul.addr %s103, 8
          %s105 = scalar_lea.vmem [#allocation2], %s104
          %s106 = smul.u32 2, %s21
          %108 = vsyncadd %s102, 0
          %s109 = smul.addr %s20, 2
          %s110 = sadd.s32 %s106, %s109
          %s111 = smul.addr %s110, 4
          %s112 = scalar_lea.hbm %s0, %s111
          %s113 = sshll.u32 %s112, 4
          %s114 = int_to_ptr.hbm [resolvable:$true] %s113
          %s115 = sshll.u32 %s105, 4
          %s116 = int_to_ptr.vmem [resolvable:$true] %s115
          %121 = dma.hbm_to_vmem [thread:$0]  %s114, 128, %s116, %s102, 64, 64, 4
        $region20: #{tpu_custom_call.1} parent=15 // pred_fallthru
          _
      $region16: #{tpu_custom_call.1} parent=5 // pred_fallthru
        _
      %p122 = scmp.le.s32.totalorder 1, %s13
      %p123 = scmp.lt.s32.totalorder %s13, 3
      %p124 = pnand %p122, %p123
      %p125 = pneg %p124
      // Predicated region
      $region21: #{tpu_custom_call.1} parent=5 // pred_check
        _
      $region22: #{tpu_custom_call.1} parent=5 // pred_check_branch
        %127 = sbr.rel (%p124) target = $region24
      $region23: #{tpu_custom_call.1} parent=5 // pred_region
        %s128 = ssub.s32 %s13, 1
        %s129 = sand.u32 %s40, 1
        %s130 = scalar_lea.sflag [#allocation3], %s129
        %s131 = sand.u32 %s40, 1
        %s132 = smul.addr %s131, 8
        %s133 = scalar_lea.vmem [#allocation2], %s132
        // Predicated region
        $region25: #{tpu_custom_call.1} parent=23 // pred_check
          %p134 = pneg %p53
        $region26: #{tpu_custom_call.1} parent=23 // pred_check_branch
          %136 = sbr.rel (%p134) target = $region28
        $region27: #{tpu_custom_call.1} parent=23 // pred_region
          %138 = dma.done %s130, 128
        $region28: #{tpu_custom_call.1} parent=23 // pred_fallthru
          _
        %s139 = sand.u32 %s40, 1
        %s140 = scalar_lea.sflag [#allocation3], %s139
        %s141 = sand.u32 %s40, 1
        %s142 = smul.addr %s141, 8
        %s143 = scalar_lea.vmem [#allocation2], %s142
        %p144 = pneg %p53
        %p145 = pneg %p50
        %p146 = pneg %p79
        %p147 = pneg %p76
        %s148 = sand.u32 %s66, 1
        %s149 = scalar_lea.sflag [#allocation4], %s148
        %s150 = sand.u32 %s66, 1
        %s151 = smul.addr %s150, 128
        %s152 = scalar_lea.vmem [#allocation5], %s151
        %s153 = smul.u32 2, %s23
        %p155 = scmp.eq.s32.totalorder %s23, 0
        // Predicated region
        $region29: #{tpu_custom_call.1} parent=23 // pred_check
          %p156 = pneg %p155
        $region30: #{tpu_custom_call.1} parent=23 // pred_check_branch
          %158 = sbr.rel (%p156) target = $region32
        $region31: #{tpu_custom_call.1} parent=23 // pred_region
          %159 = vst [vmem:[%s152] sm:$0xff] 0.0
          %160 = vst [vmem:[%s152 + $0x8] sm:$0xff] 0.0
          %161 = vst [vmem:[%s152 + $0x10] sm:$0xff] 0.0
          %162 = vst [vmem:[%s152 + $0x18] sm:$0xff] 0.0
          %163 = vst [vmem:[%s152 + $0x20] sm:$0xff] 0.0
          %164 = vst [vmem:[%s152 + $0x28] sm:$0xff] 0.0
          %165 = vst [vmem:[%s152 + $0x30] sm:$0xff] 0.0
          %166 = vst [vmem:[%s152 + $0x38] sm:$0xff] 0.0
          %167 = vst [vmem:[%s152 + $0x40] sm:$0xff] 0.0
          %168 = vst [vmem:[%s152 + $0x48] sm:$0xff] 0.0
          %169 = vst [vmem:[%s152 + $0x50] sm:$0xff] 0.0
          %170 = vst [vmem:[%s152 + $0x58] sm:$0xff] 0.0
          %171 = vst [vmem:[%s152 + $0x60] sm:$0xff] 0.0
          %172 = vst [vmem:[%s152 + $0x68] sm:$0xff] 0.0
          %173 = vst [vmem:[%s152 + $0x70] sm:$0xff] 0.0
          %174 = vst [vmem:[%s152 + $0x78] sm:$0xff] 0.0
        $region32: #{tpu_custom_call.1} parent=23 // pred_fallthru
          _
        %v175 = vld [vmem:[%s133] sm:$0xf]
        %v176 = vld [vmem:[%s133 + $0x4] sm:$0xf]
        %v177 = vld [vmem:[%s152] sm:$0xff]
        %v178 = vld [vmem:[%s152 + $0x8] sm:$0xff]
        %v179 = vld [vmem:[%s152 + $0x10] sm:$0xff]
        %v180 = vld [vmem:[%s152 + $0x18] sm:$0xff]
        %v181 = vld [vmem:[%s152 + $0x20] sm:$0xff]
        %v182 = vld [vmem:[%s152 + $0x28] sm:$0xff]
        %v183 = vld [vmem:[%s152 + $0x30] sm:$0xff]
        %v184 = vld [vmem:[%s152 + $0x38] sm:$0xff]
        %v185 = vld [vmem:[%s152 + $0x40] sm:$0xff]
        %v186 = vld [vmem:[%s152 + $0x48] sm:$0xff]
        %v187 = vld [vmem:[%s152 + $0x50] sm:$0xff]
        %v188 = vld [vmem:[%s152 + $0x58] sm:$0xff]
        %v189 = vld [vmem:[%s152 + $0x60] sm:$0xff]
        %v190 = vld [vmem:[%s152 + $0x68] sm:$0xff]
        %v191 = vld [vmem:[%s152 + $0x70] sm:$0xff]
        %v192 = vld [vmem:[%s152 + $0x78] sm:$0xff]
        %v195 = vunpack.c.l.b16 %v175
        %v196 = vunpack.c.l.b16 %v176
        %v197 = vpack.c.b16 %v196, %v195
        %199 = vxpose.xlu0.c.b16.start [1/8] %v197, 128
        %200 = vxpose.xlu0.c.b16.cont [2/8] 0, 128
        %201 = vxpose.xlu0.c.b16.cont [3/8] 0, 128
        %202 = vxpose.xlu0.c.b16.cont [4/8] 0, 128
        %203 = vxpose.xlu0.c.b16.cont [5/8] 0, 128
        %204 = vxpose.xlu0.c.b16.cont [6/8] 0, 128
        %205 = vxpose.xlu0.c.b16.cont [7/8] 0, 128
        %206 = vxpose.xlu0.c.b16.end [8/8] 0, 128
        %v207 = vpop.trf.xlu0
        %v208 = vpop.trf.xlu0
        %v209 = vpop.trf.xlu0
        %v210 = vpop.trf.xlu0
        %v211 = vpop.trf.xlu0
        %v212 = vpop.trf.xlu0
        %v213 = vpop.trf.xlu0
        %v214 = vpop.trf.xlu0
        %vm215 = vcmask 130048
        %v217 = vsel %vm215, %v207, 0
        %v220 = vsel %vm215, %v208, 0
        %v223 = vsel %vm215, %v209, 0
        %v226 = vsel %vm215, %v210, 0
        %v229 = vsel %vm215, %v211, 0
        %v232 = vsel %vm215, %v212, 0
        %v235 = vsel %vm215, %v213, 0
        %v238 = vsel %vm215, %v214, 0
        %240 = vmatpush.bf16.msra.mxu0 0
        %241 = vmatpush.bf16.msra.mxu0 0
        %242 = vmatpush.bf16.msra.mxu0 0
        %243 = vmatpush.bf16.msra.mxu0 0
        %244 = vmatpush.bf16.msra.mxu0 0
        %245 = vmatpush.bf16.msra.mxu0 0
        %246 = vmatpush.bf16.msra.mxu0 0
        %247 = vmatpush.bf16.msra.mxu0 %v197
        %248 = vmatmul.bf16.gmra.mxu0 %v217
        %v249 = vpop.f32.mrf.mxu0
        %v250 = vadd.f32 0.0, %v249
        %v251 = vpop.f32.mrf.mxu0
        %v252 = vadd.f32 0.0, %v251
        %253 = vmatmul.bf16.gmra.mxu0 %v220
        %v254 = vpop.f32.mrf.mxu0
        %v255 = vadd.f32 0.0, %v254
        %v256 = vpop.f32.mrf.mxu0
        %v257 = vadd.f32 0.0, %v256
        %258 = vmatmul.bf16.gmra.mxu0 %v223
        %v259 = vpop.f32.mrf.mxu0
        %v260 = vadd.f32 0.0, %v259
        %v261 = vpop.f32.mrf.mxu0
        %v262 = vadd.f32 0.0, %v261
        %263 = vmatmul.bf16.gmra.mxu0 %v226
        %v264 = vpop.f32.mrf.mxu0
        %v265 = vadd.f32 0.0, %v264
        %v266 = vpop.f32.mrf.mxu0
        %v267 = vadd.f32 0.0, %v266
        %268 = vmatmul.bf16.gmra.mxu0 %v229
        %v269 = vpop.f32.mrf.mxu0
        %v270 = vadd.f32 0.0, %v269
        %v271 = vpop.f32.mrf.mxu0
        %v272 = vadd.f32 0.0, %v271
        %273 = vmatmul.bf16.gmra.mxu0 %v232
        %v274 = vpop.f32.mrf.mxu0
        %v275 = vadd.f32 0.0, %v274
        %v276 = vpop.f32.mrf.mxu0
        %v277 = vadd.f32 0.0, %v276
        %278 = vmatmul.bf16.gmra.mxu0 %v235
        %v279 = vpop.f32.mrf.mxu0
        %v280 = vadd.f32 0.0, %v279
        %v281 = vpop.f32.mrf.mxu0
        %v282 = vadd.f32 0.0, %v281
        %283 = vmatmul.bf16.gmra.mxu0 %v238
        %v284 = vpop.f32.mrf.mxu0
        %v285 = vadd.f32 0.0, %v284
        %v286 = vpop.f32.mrf.mxu0
        %v287 = vadd.f32 0.0, %v286
        %288 = vdwg.mxu0
        %v289 = vadd.f32 %v177, %v250
        %v290 = vadd.f32 %v178, %v252
        %v291 = vadd.f32 %v179, %v255
        %v292 = vadd.f32 %v180, %v257
        %v293 = vadd.f32 %v181, %v260
        %v294 = vadd.f32 %v182, %v262
        %v295 = vadd.f32 %v183, %v265
        %v296 = vadd.f32 %v184, %v267
        %v297 = vadd.f32 %v185, %v270
        %v298 = vadd.f32 %v186, %v272
        %v299 = vadd.f32 %v187, %v275
        %v300 = vadd.f32 %v188, %v277
        %v301 = vadd.f32 %v189, %v280
        %v302 = vadd.f32 %v190, %v282
        %v303 = vadd.f32 %v191, %v285
        %v304 = vadd.f32 %v192, %v287
        %305 = vst [vmem:[%s152] sm:$0xff] %v289
        %306 = vst [vmem:[%s152 + $0x8] sm:$0xff] %v290
        %307 = vst [vmem:[%s152 + $0x10] sm:$0xff] %v291
        %308 = vst [vmem:[%s152 + $0x18] sm:$0xff] %v292
        %309 = vst [vmem:[%s152 + $0x20] sm:$0xff] %v293
        %310 = vst [vmem:[%s152 + $0x28] sm:$0xff] %v294
        %311 = vst [vmem:[%s152 + $0x30] sm:$0xff] %v295
        %312 = vst [vmem:[%s152 + $0x38] sm:$0xff] %v296
        %313 = vst [vmem:[%s152 + $0x40] sm:$0xff] %v297
        %314 = vst [vmem:[%s152 + $0x48] sm:$0xff] %v298
        %315 = vst [vmem:[%s152 + $0x50] sm:$0xff] %v299
        %316 = vst [vmem:[%s152 + $0x58] sm:$0xff] %v300
        %317 = vst [vmem:[%s152 + $0x60] sm:$0xff] %v301
        %318 = vst [vmem:[%s152 + $0x68] sm:$0xff] %v302
        %319 = vst [vmem:[%s152 + $0x70] sm:$0xff] %v303
        %320 = vst [vmem:[%s152 + $0x78] sm:$0xff] %v304
        %s321 = sand.u32 %s66, 1
        %s322 = scalar_lea.sflag [#allocation4], %s321
        %s323 = sand.u32 %s66, 1
        %s324 = smul.addr %s323, 128
        %s325 = scalar_lea.vmem [#allocation5], %s324
        // Predicated region
        $region33: #{tpu_custom_call.1} parent=23 // pred_check
          %p326 = pneg %p76
        $region34: #{tpu_custom_call.1} parent=23 // pred_check_branch
          %328 = sbr.rel (%p326) target = $region36
        $region35: #{tpu_custom_call.1} parent=23 // pred_region
          %330 = vsyncadd %s322, 0
          %s331 = smul.addr %s22, 16
          %s332 = smul.addr %s331, 8
          %s333 = scalar_lea.hbm %s1, %s332
          %s334 = sshll.u32 %s325, 4
          %s335 = int_to_ptr.vmem [resolvable:$true] %s334
          %s336 = sshll.u32 %s333, 4
          %s337 = int_to_ptr.hbm [resolvable:$true] %s336
          %342 = dma.vmem_to_hbm [thread:$0]  %s335, 2048, %s337, %s322, 128, 128, 8
        $region36: #{tpu_custom_call.1} parent=23 // pred_fallthru
          _
      $region24: #{tpu_custom_call.1} parent=5 // pred_fallthru
        _
      %p343 = scmp.le.s32.totalorder 2, %s13
      // Predicated region
      $region37: #{tpu_custom_call.1} parent=5 // pred_check
        %p344 = pneg %p343
      $region38: #{tpu_custom_call.1} parent=5 // pred_check_branch
        %346 = sbr.rel (%p344) target = $region40
      $region39: #{tpu_custom_call.1} parent=5 // pred_region
        %s347 = ssub.s32 %s13, 2
        // Predicated region
        $region41: #{tpu_custom_call.1} parent=39 // pred_check
          %p348 = pneg %p82
        $region42: #{tpu_custom_call.1} parent=39 // pred_check_branch
          %350 = sbr.rel (%p348) target = $region44
        $region43: #{tpu_custom_call.1} parent=39 // pred_region
          %s351 = sand.u32 %s67, 1
          %s352 = scalar_lea.sflag [#allocation4], %s351
          %s353 = sand.u32 %s67, 1
          %s354 = smul.addr %s353, 128
          %s355 = scalar_lea.vmem [#allocation5], %s354
          %357 = dma.done %s352, 2048
        $region44: #{tpu_custom_call.1} parent=39 // pred_fallthru
          _
      $region40: #{tpu_custom_call.1} parent=5 // pred_fallthru
        _
    $region6: #{tpu_custom_call.1} parent=1 // loop_footer
      %s17 = sadd.s32 1, %s13
    $region7: #{tpu_custom_call.1} parent=1 // loop_footer_branch
      %12 = sbr.rel target = $region3
    $region8: #{tpu_custom_call.1} parent=1 // loop_exit
      _
    %358 = vsyncpa [#allocation3], 1
    %s359 = scalar_lea.sflag [#allocation3], 1
    %360 = vsyncpa %s359, 1
    %361 = vsyncpa [#allocation4], 1
    %s362 = scalar_lea.sflag [#allocation4], 1
    %363 = vsyncpa %s362, 1

</llo_original>
